<compile_context>
chip_gen: v7x
topology: tpu7x:2x2x1
jax: 0.10.0
libtpu: 0.0.40
codegen_flags: <defaults>
</compile_context>

<pallas_src>
import functools

import jax
import jax.numpy as jnp
from jax import lax
from jax.experimental import pallas as pl
from jax.experimental.pallas import tpu as pltpu


def _round_up(x, m):
    return (x + m - 1) // m * m


def _cdiv(a, b):
    return (a + b - 1) // b


# ----------------------------------------------------------------------------
# Fused Pallas kernel:
#   multi-hot(ids_flat) + bias-lane  @  M (= emb@W1 stacked, + b1 row)
#   -> ReLU -> @ W2 + b2 -> sigmoid
# ----------------------------------------------------------------------------
def _fused_head_kernel(ids_ref, m_ref, w2_ref, b2_ref, out_ref, *,
                       num_tokens, k_pad, bias_idx):
    ids = ids_ref[...]                                          # (TB, T) int32
    tb = ids.shape[0]
    lane_k = lax.broadcasted_iota(jnp.int32, (1, k_pad), 1)     # (1, Kp)

    # Constant-1 lane at bias_idx folds the fc1 bias (b1 row of M) into the
    # fused matmul.
    onehot = jnp.broadcast_to(jnp.where(lane_k == bias_idx, 1.0, 0.0),
                              (tb, k_pad))                      # (TB, Kp) f32
    # Flattened ids live in disjoint [t*V, (t+1)*V) ranges, so summing the
    # per-token one-hots never collides; masked / padded tokens point at the
    # sentinel (all-zero) row of M and contribute nothing.
    for t in range(num_tokens):
        onehot = onehot + jnp.where(ids[:, t:t + 1] == lane_k, 1.0, 0.0)

    # Single MXU-native K=256 pass: gather + flatten + fc1 + b1 all at once.
    h = jnp.dot(onehot, m_ref[...],
                preferred_element_type=jnp.float32)             # (TB, Hp)
    h = jnp.maximum(h, 0.0)                                     # ReLU
    o = jnp.dot(h, w2_ref[...],
                preferred_element_type=jnp.float32) + b2_ref[...]
    out_ref[...] = jax.nn.sigmoid(o).astype(out_ref.dtype)


def _choose_batch_tiling(batch):
    """tile_b (8-aligned, <=128) and padded batch; >=2 grid steps when the
    batch allows it so ("parallel",) can use both v7x TensorCores."""
    b8 = _round_up(max(batch, 1), 8)
    if b8 <= 8:
        return b8, b8
    n_steps = max(2, _cdiv(b8, 128))
    tile_b = _round_up(_cdiv(b8, n_steps), 8)
    return tile_b, n_steps * tile_b


def splice_head_pallas(ids_flat, m, w2_k, b2_k, *, bias_idx):
    """ids_flat: (B, T) int32 (id + t*V; masked -> sentinel zero row of M).
    m: (Kp, Hp) fused emb@W1 with b1 row; w2_k: (Hp, Op); b2_k: (1, Op).
    Returns (B_pad, Op) float32."""
    batch, num_tokens = ids_flat.shape
    k_pad = m.shape[0]
    o_pad = b2_k.shape[-1]

    tile_b, b_pad = _choose_batch_tiling(batch)
    if b_pad != batch:
        # Padded rows target the last (all-zero) row of M; their outputs are
        # garbage sigmoid values and are sliced off by the caller.
        ids_flat = jnp.pad(ids_flat, ((0, b_pad - batch), (0, 0)),
                           constant_values=k_pad - 1)

    kernel = functools.partial(_fused_head_kernel, num_tokens=num_tokens,
                               k_pad=k_pad, bias_idx=bias_idx)

    return pl.pallas_call(
        kernel,
        out_shape=jax.ShapeDtypeStruct((b_pad, o_pad), jnp.float32),
        grid_spec=pltpu.PrefetchScalarGridSpec(
            num_scalar_prefetch=0,
            grid=(b_pad // tile_b,),
            in_specs=[
                pl.BlockSpec((tile_b, num_tokens), lambda i: (i, 0)),  # ids
                pl.BlockSpec(m.shape, lambda i: (0, 0)),               # M
                pl.BlockSpec(w2_k.shape, lambda i: (0, 0)),            # W2
                pl.BlockSpec(b2_k.shape, lambda i: (0, 0)),            # b2
            ],
            out_specs=pl.BlockSpec((tile_b, o_pad), lambda i: (i, 0)),
        ),
        compiler_params=pltpu.CompilerParams(
            dimension_semantics=("parallel",)),
    )(ids_flat, m, w2_k, b2_k)


# ----------------------------------------------------------------------------
# Model wrapper
# ----------------------------------------------------------------------------
class SplicePredictorFromBERTPallas:
    def __init__(self, key, vocab_size=16, embedding_dim=32, output_length=128,
                 hidden_dim=64, bert_token_count=10):
        self.vocab_size = vocab_size
        self.embedding_dim = embedding_dim
        self.output_length = output_length
        self.hidden_dim = hidden_dim
        self.bert_token_count = bert_token_count
        flattened_dim = bert_token_count * embedding_dim

        k_emb, k_w1, k_b1, k_w2, k_b2 = jax.random.split(key, 5)
        # Deterministic stand-in for the frozen BERT: token embedding table.
        self.embedding = jax.random.normal(
            k_emb, (vocab_size, embedding_dim), jnp.float32) * 0.02
        # "PyTorch-layout" parameters (stored (in, out) so x @ W + b).
        self.w1 = jax.random.normal(
            k_w1, (flattened_dim, hidden_dim), jnp.float32) * 0.02
        self.b1 = jax.random.normal(k_b1, (hidden_dim,), jnp.float32) * 0.02
        self.w2 = jax.random.normal(
            k_w2, (hidden_dim, output_length), jnp.float32) * 0.02
        self.b2 = jax.random.normal(k_b2, (output_length,), jnp.float32) * 0.02

        # ---- kernel-layout weights ----------------------------------------
        h_pad = _round_up(hidden_dim, 128)          # lane-dense fc1 output
        o_pad = _round_up(output_length, 128)       # lane-dense final store
        tv = bert_token_count * vocab_size
        self.bias_idx = tv                          # constant-1 lane -> b1 row
        self.sentinel_idx = tv + 1                  # masked tokens -> zero row
        k_pad = _round_up(tv + 2, 256)              # MXU-native contraction dim
        self.k_pad = k_pad

        w1_pad = jnp.pad(self.w1, ((0, 0), (0, h_pad - hidden_dim)))
        w1_tok = w1_pad.reshape(bert_token_count, embedding_dim, h_pad)
        # M[t*V + v] = emb_table[v] @ W1[t]  — fuses the gather + flatten + fc1.
        m_tok = jnp.einsum('ve,teh->tvh', self.embedding, w1_tok,
                           preferred_element_type=jnp.float32)
        m_tok = m_tok.reshape(tv, h_pad)
        b1_row = jnp.pad(self.b1, (0, h_pad - hidden_dim)).reshape(1, h_pad)
        self.m = jnp.concatenate(
            [m_tok, b1_row,
             jnp.zeros((k_pad - tv - 1, h_pad), jnp.float32)], axis=0)
        self.w2_k = jnp.pad(self.w2, ((0, h_pad - hidden_dim),
                                      (0, o_pad - output_length)))
        self.b2_k = jnp.pad(self.b2.reshape(1, -1),
                            ((0, 0), (0, o_pad - output_length)))

    def __call__(self, input_ids, attention_mask):
        batch, seq_len = input_ids.shape
        t = self.bert_token_count
        # Token-axis truncate / zero-pad on the tiny int ids & mask (bytes of
        # work); padded positions get mask=0 -> sentinel -> zero contribution,
        # matching the PyTorch zero-pad of bert_out.
        if seq_len >= t:
            ids = input_ids[:, :t]
            mask = attention_mask[:, :t]
        else:
            pad = t - seq_len
            ids = jnp.pad(input_ids, ((0, 0), (0, pad)))
            mask = jnp.pad(attention_mask, ((0, 0), (0, pad)))
        ids = jnp.clip(ids.astype(jnp.int32), 0, self.vocab_size - 1)
        # Flatten token position into the id (row index of M); encode the mask
        # / token padding as the sentinel (all-zero) row -> no mask DMA needed.
        offs = (jnp.arange(t, dtype=jnp.int32) * self.vocab_size)[None, :]
        ids_flat = jnp.where(mask.astype(jnp.int32) != 0,
                             ids + offs, self.sentinel_idx)

        out = splice_head_pallas(ids_flat, self.m, self.w2_k, self.b2_k,
                                 bias_idx=self.bias_idx)
        return out[:batch, :self.output_length]


# ----------------------------------------------------------------------------
# Pure-JAX reference (faithful un-padded math) for the correctness check
# ----------------------------------------------------------------------------
def _reference(model, input_ids, attention_mask):
    ids = jnp.clip(input_ids.astype(jnp.int32), 0, model.vocab_size - 1)
    emb = jnp.take(model.embedding, ids, axis=0)
    bert_out = emb * attention_mask[..., None].astype(jnp.float32)
    b, s, e = bert_out.shape
    t = model.bert_token_count
    if s >= t:
        bert_out = bert_out[:, :t, :]
    else:
        bert_out = jnp.concatenate(
            [bert_out, jnp.zeros((b, t - s, e), bert_out.dtype)], axis=1)
    flat = bert_out.reshape(b, -1)
    h = jnp.maximum(flat @ model.w1 + model.b1, 0.0)
    return jax.nn.sigmoid(h @ model.w2 + model.b2)


if __name__ == "__main__":
    key = jax.random.PRNGKey(0)
    k_model, k_ids = jax.random.split(key)

    batch, seq_len, vocab = 2, 8, 16
    model = SplicePredictorFromBERTPallas(
        k_model, vocab_size=vocab, embedding_dim=32,
        output_length=128, hidden_dim=64, bert_token_count=10)

    input_ids = jax.random.randint(k_ids, (batch, seq_len), 0, vocab, jnp.int32)
    attention_mask = jnp.ones((batch, seq_len), jnp.int32)

    out = jax.block_until_ready(model(input_ids, attention_mask))
    ref = _reference(model, input_ids, attention_mask)

    assert out.shape == (batch, model.output_length), out.shape
    assert jnp.allclose(out, ref, atol=1e-5, rtol=1e-5), "mismatch vs reference"

    print("KERNEL_OK")
</pallas_src>

<mosaic_0001>
module attributes {stable_mosaic.version = 11 : i64} {
  func.func @_fused_head_kernel(%arg0: i32, %arg1: memref<8x10xi32, #tpu.memory_space<vmem>>, %arg2: memref<256x128xf32, #tpu.memory_space<vmem>>, %arg3: memref<128x128xf32, #tpu.memory_space<vmem>>, %arg4: memref<1x128xf32, #tpu.memory_space<vmem>>, %arg5: memref<8x128xf32, #tpu.memory_space<vmem>>) attributes {dimension_semantics = [#tpu.dimension_semantics<parallel>], iteration_bounds = array<i64: 1>, scalar_prefetch = 0 : i64, scratch_operands = 0 : i64, tpu.core_type = #tpu.core_type<tc>, window_params = [{transform_indices = @transform_0, window_bounds = array<i64: 8, 10>}, {pipeline_mode = #tpu.pipeline_mode<synchronous>, transform_indices = @transform_1, window_bounds = array<i64: 256, 128>}, {pipeline_mode = #tpu.pipeline_mode<synchronous>, transform_indices = @transform_2, window_bounds = array<i64: 128, 128>}, {pipeline_mode = #tpu.pipeline_mode<synchronous>, transform_indices = @transform_3, window_bounds = array<i64: 1, 128>}, {transform_indices = @transform_4, window_bounds = array<i64: 8, 128>}]} {
    %c0 = arith.constant 0 : index
    %c0_0 = arith.constant 0 : index
    %0 = vector.load %arg1[%c0, %c0_0] : memref<8x10xi32, #tpu.memory_space<vmem>>, vector<8x10xi32>
    %1 = tpu.iota {dimensions = array<i32: 1>} : vector<1x256xi32>
    %c160_i32 = arith.constant 160 : i32
    %2 = vector.broadcast %c160_i32 : i32 to vector<1x256xi32>
    %3 = arith.cmpi eq, %1, %2 : vector<1x256xi32>
    %cst = arith.constant 1.000000e+00 : f32
    %cst_1 = arith.constant 0.000000e+00 : f32
    %4 = vector.broadcast %cst : f32 to vector<1x256xf32>
    %5 = vector.broadcast %cst_1 : f32 to vector<1x256xf32>
    %6 = arith.select %3, %4, %5 : vector<1x256xi1>, vector<1x256xf32>
    %7 = vector.shape_cast %6 : vector<1x256xf32> to vector<1x256xf32>
    %8 = vector.broadcast %7 : vector<1x256xf32> to vector<8x256xf32>
    %9 = vector.extract_strided_slice %0 {offsets = [0, 0], sizes = [8, 1], strides = [1, 1]} : vector<8x10xi32> to vector<8x1xi32>
    %10 = vector.broadcast %9 : vector<8x1xi32> to vector<8x256xi32>
    %11 = vector.broadcast %1 : vector<1x256xi32> to vector<8x256xi32>
    %12 = arith.cmpi eq, %10, %11 : vector<8x256xi32>
    %cst_2 = arith.constant 1.000000e+00 : f32
    %cst_3 = arith.constant 0.000000e+00 : f32
    %13 = vector.broadcast %cst_2 : f32 to vector<8x256xf32>
    %14 = vector.broadcast %cst_3 : f32 to vector<8x256xf32>
    %15 = arith.select %12, %13, %14 : vector<8x256xi1>, vector<8x256xf32>
    %16 = arith.addf %8, %15 : vector<8x256xf32>
    %17 = vector.extract_strided_slice %0 {offsets = [0, 1], sizes = [8, 1], strides = [1, 1]} : vector<8x10xi32> to vector<8x1xi32>
    %18 = vector.broadcast %17 : vector<8x1xi32> to vector<8x256xi32>
    %19 = vector.broadcast %1 : vector<1x256xi32> to vector<8x256xi32>
    %20 = arith.cmpi eq, %18, %19 : vector<8x256xi32>
    %cst_4 = arith.constant 1.000000e+00 : f32
    %cst_5 = arith.constant 0.000000e+00 : f32
    %21 = vector.broadcast %cst_4 : f32 to vector<8x256xf32>
    %22 = vector.broadcast %cst_5 : f32 to vector<8x256xf32>
    %23 = arith.select %20, %21, %22 : vector<8x256xi1>, vector<8x256xf32>
    %24 = arith.addf %16, %23 : vector<8x256xf32>
    %25 = vector.extract_strided_slice %0 {offsets = [0, 2], sizes = [8, 1], strides = [1, 1]} : vector<8x10xi32> to vector<8x1xi32>
    %26 = vector.broadcast %25 : vector<8x1xi32> to vector<8x256xi32>
    %27 = vector.broadcast %1 : vector<1x256xi32> to vector<8x256xi32>
    %28 = arith.cmpi eq, %26, %27 : vector<8x256xi32>
    %cst_6 = arith.constant 1.000000e+00 : f32
    %cst_7 = arith.constant 0.000000e+00 : f32
    %29 = vector.broadcast %cst_6 : f32 to vector<8x256xf32>
    %30 = vector.broadcast %cst_7 : f32 to vector<8x256xf32>
    %31 = arith.select %28, %29, %30 : vector<8x256xi1>, vector<8x256xf32>
    %32 = arith.addf %24, %31 : vector<8x256xf32>
    %33 = vector.extract_strided_slice %0 {offsets = [0, 3], sizes = [8, 1], strides = [1, 1]} : vector<8x10xi32> to vector<8x1xi32>
    %34 = vector.broadcast %33 : vector<8x1xi32> to vector<8x256xi32>
    %35 = vector.broadcast %1 : vector<1x256xi32> to vector<8x256xi32>
    %36 = arith.cmpi eq, %34, %35 : vector<8x256xi32>
    %cst_8 = arith.constant 1.000000e+00 : f32
    %cst_9 = arith.constant 0.000000e+00 : f32
    %37 = vector.broadcast %cst_8 : f32 to vector<8x256xf32>
    %38 = vector.broadcast %cst_9 : f32 to vector<8x256xf32>
    %39 = arith.select %36, %37, %38 : vector<8x256xi1>, vector<8x256xf32>
    %40 = arith.addf %32, %39 : vector<8x256xf32>
    %41 = vector.extract_strided_slice %0 {offsets = [0, 4], sizes = [8, 1], strides = [1, 1]} : vector<8x10xi32> to vector<8x1xi32>
    %42 = vector.broadcast %41 : vector<8x1xi32> to vector<8x256xi32>
    %43 = vector.broadcast %1 : vector<1x256xi32> to vector<8x256xi32>
    %44 = arith.cmpi eq, %42, %43 : vector<8x256xi32>
    %cst_10 = arith.constant 1.000000e+00 : f32
    %cst_11 = arith.constant 0.000000e+00 : f32
    %45 = vector.broadcast %cst_10 : f32 to vector<8x256xf32>
    %46 = vector.broadcast %cst_11 : f32 to vector<8x256xf32>
    %47 = arith.select %44, %45, %46 : vector<8x256xi1>, vector<8x256xf32>
    %48 = arith.addf %40, %47 : vector<8x256xf32>
    %49 = vector.extract_strided_slice %0 {offsets = [0, 5], sizes = [8, 1], strides = [1, 1]} : vector<8x10xi32> to vector<8x1xi32>
    %50 = vector.broadcast %49 : vector<8x1xi32> to vector<8x256xi32>
    %51 = vector.broadcast %1 : vector<1x256xi32> to vector<8x256xi32>
    %52 = arith.cmpi eq, %50, %51 : vector<8x256xi32>
    %cst_12 = arith.constant 1.000000e+00 : f32
    %cst_13 = arith.constant 0.000000e+00 : f32
    %53 = vector.broadcast %cst_12 : f32 to vector<8x256xf32>
    %54 = vector.broadcast %cst_13 : f32 to vector<8x256xf32>
    %55 = arith.select %52, %53, %54 : vector<8x256xi1>, vector<8x256xf32>
    %56 = arith.addf %48, %55 : vector<8x256xf32>
    %57 = vector.extract_strided_slice %0 {offsets = [0, 6], sizes = [8, 1], strides = [1, 1]} : vector<8x10xi32> to vector<8x1xi32>
    %58 = vector.broadcast %57 : vector<8x1xi32> to vector<8x256xi32>
    %59 = vector.broadcast %1 : vector<1x256xi32> to vector<8x256xi32>
    %60 = arith.cmpi eq, %58, %59 : vector<8x256xi32>
    %cst_14 = arith.constant 1.000000e+00 : f32
    %cst_15 = arith.constant 0.000000e+00 : f32
    %61 = vector.broadcast %cst_14 : f32 to vector<8x256xf32>
    %62 = vector.broadcast %cst_15 : f32 to vector<8x256xf32>
    %63 = arith.select %60, %61, %62 : vector<8x256xi1>, vector<8x256xf32>
    %64 = arith.addf %56, %63 : vector<8x256xf32>
    %65 = vector.extract_strided_slice %0 {offsets = [0, 7], sizes = [8, 1], strides = [1, 1]} : vector<8x10xi32> to vector<8x1xi32>
    %66 = vector.broadcast %65 : vector<8x1xi32> to vector<8x256xi32>
    %67 = vector.broadcast %1 : vector<1x256xi32> to vector<8x256xi32>
    %68 = arith.cmpi eq, %66, %67 : vector<8x256xi32>
    %cst_16 = arith.constant 1.000000e+00 : f32
    %cst_17 = arith.constant 0.000000e+00 : f32
    %69 = vector.broadcast %cst_16 : f32 to vector<8x256xf32>
    %70 = vector.broadcast %cst_17 : f32 to vector<8x256xf32>
    %71 = arith.select %68, %69, %70 : vector<8x256xi1>, vector<8x256xf32>
    %72 = arith.addf %64, %71 : vector<8x256xf32>
    %73 = vector.extract_strided_slice %0 {offsets = [0, 8], sizes = [8, 1], strides = [1, 1]} : vector<8x10xi32> to vector<8x1xi32>
    %74 = vector.broadcast %73 : vector<8x1xi32> to vector<8x256xi32>
    %75 = vector.broadcast %1 : vector<1x256xi32> to vector<8x256xi32>
    %76 = arith.cmpi eq, %74, %75 : vector<8x256xi32>
    %cst_18 = arith.constant 1.000000e+00 : f32
    %cst_19 = arith.constant 0.000000e+00 : f32
    %77 = vector.broadcast %cst_18 : f32 to vector<8x256xf32>
    %78 = vector.broadcast %cst_19 : f32 to vector<8x256xf32>
    %79 = arith.select %76, %77, %78 : vector<8x256xi1>, vector<8x256xf32>
    %80 = arith.addf %72, %79 : vector<8x256xf32>
    %81 = vector.extract_strided_slice %0 {offsets = [0, 9], sizes = [8, 1], strides = [1, 1]} : vector<8x10xi32> to vector<8x1xi32>
    %82 = vector.broadcast %81 : vector<8x1xi32> to vector<8x256xi32>
    %83 = vector.broadcast %1 : vector<1x256xi32> to vector<8x256xi32>
    %84 = arith.cmpi eq, %82, %83 : vector<8x256xi32>
    %cst_20 = arith.constant 1.000000e+00 : f32
    %cst_21 = arith.constant 0.000000e+00 : f32
    %85 = vector.broadcast %cst_20 : f32 to vector<8x256xf32>
    %86 = vector.broadcast %cst_21 : f32 to vector<8x256xf32>
    %87 = arith.select %84, %85, %86 : vector<8x256xi1>, vector<8x256xf32>
    %88 = arith.addf %80, %87 : vector<8x256xf32>
    %c0_22 = arith.constant 0 : index
    %c0_23 = arith.constant 0 : index
    %89 = vector.load %arg2[%c0_22, %c0_23] : memref<256x128xf32, #tpu.memory_space<vmem>>, vector<256x128xf32>
    %cst_24 = arith.constant dense<0.000000e+00> : vector<8x128xf32>
    %90 = tpu.matmul %88, %89, %cst_24 {dimension_numbers = #tpu.dot_dimension_numbers<[1], [0], [0], [1], [0, 0, 1, 1], [], []>} : vector<8x256xf32>, vector<256x128xf32>, vector<8x128xf32> -> vector<8x128xf32>
    %cst_25 = arith.constant 0.000000e+00 : f32
    %91 = vector.broadcast %cst_25 : f32 to vector<8x128xf32>
    %92 = arith.maximumf %90, %91 : vector<8x128xf32>
    %c0_26 = arith.constant 0 : index
    %c0_27 = arith.constant 0 : index
    %93 = vector.load %arg3[%c0_26, %c0_27] : memref<128x128xf32, #tpu.memory_space<vmem>>, vector<128x128xf32>
    %cst_28 = arith.constant dense<0.000000e+00> : vector<8x128xf32>
    %94 = tpu.matmul %92, %93, %cst_28 {dimension_numbers = #tpu.dot_dimension_numbers<[1], [0], [0], [1], [0, 0, 1, 1], [], []>} : vector<8x128xf32>, vector<128x128xf32>, vector<8x128xf32> -> vector<8x128xf32>
    %c0_29 = arith.constant 0 : index
    %c0_30 = arith.constant 0 : index
    %95 = vector.load %arg4[%c0_29, %c0_30] : memref<1x128xf32, #tpu.memory_space<vmem>>, vector<1x128xf32>
    %96 = vector.broadcast %95 : vector<1x128xf32> to vector<8x128xf32>
    %97 = arith.addf %94, %96 : vector<8x128xf32>
    %98 = arith.negf %97 : vector<8x128xf32>
    %99 = math.exp %98 : vector<8x128xf32>
    %cst_31 = arith.constant 1.000000e+00 : f32
    %100 = vector.broadcast %cst_31 : f32 to vector<8x128xf32>
    %101 = arith.addf %100, %99 : vector<8x128xf32>
    %102 = arith.divf %100, %101 : vector<8x128xf32>
    %c0_32 = arith.constant 0 : index
    %c0_33 = arith.constant 0 : index
    %103 = vector.load %arg5[%c0_32, %c0_33] : memref<8x128xf32, #tpu.memory_space<vmem>>, vector<8x128xf32>
    tpu.vector_store %arg5[%c0_32, %c0_33], %102 {strides = array<i32>} : memref<8x128xf32, #tpu.memory_space<vmem>>, vector<8x128xf32>,
    return
  }
  func.func @transform_0(%arg0: i32) -> (i32, i32) {
    %c0_i32 = arith.constant 0 : i32
    %c0_i32_0 = arith.constant 0 : i32
    return %arg0, %c0_i32 : i32, i32
  }
  func.func @transform_1(%arg0: i32) -> (i32, i32) {
    %c0_i32 = arith.constant 0 : i32
    %c0_i32_0 = arith.constant 0 : i32
    %c0_i32_1 = arith.constant 0 : i32
    return %c0_i32, %c0_i32_0 : i32, i32
  }
  func.func @transform_2(%arg0: i32) -> (i32, i32) {
    %c0_i32 = arith.constant 0 : i32
    %c0_i32_0 = arith.constant 0 : i32
    %c0_i32_1 = arith.constant 0 : i32
    return %c0_i32, %c0_i32_0 : i32, i32
  }
  func.func @transform_3(%arg0: i32) -> (i32, i32) {
    %c0_i32 = arith.constant 0 : i32
    %c0_i32_0 = arith.constant 0 : i32
    %c0_i32_1 = arith.constant 0 : i32
    return %c0_i32, %c0_i32_0 : i32, i32
  }
  func.func @transform_4(%arg0: i32) -> (i32, i32) {
    %c0_i32 = arith.constant 0 : i32
    %c0_i32_0 = arith.constant 0 : i32
    return %arg0, %c0_i32 : i32, i32
  }
}

</mosaic_0001>

<llo_original>
// kernel: tpu_custom_call.1
$region0: #{tpu_custom_call.1}
  #allocation0 [shape = 'u32[]', space=smem, size = 0x4, offset = 0x4, fixed_abs, tag = 'smem constant byte address 0x4 - core index']
  #allocation1 [shape = 'u32[144,128]{1,0:T(1,128)}', space=vmem, size = 0x12000, scoped, tag = 'internal scratch']
  %s0 = inlined_call_operand.hbm [shape: s32[8,10], index: 0, kind: input, shape index: {}]
  %s1 = inlined_call_operand.hbm [shape: f32[256,128], index: 1, kind: input, shape index: {}]
  %s2 = inlined_call_operand.hbm [shape: f32[128,128], index: 2, kind: input, shape index: {}]
  %s3 = inlined_call_operand.vmem [shape: f32[1,128], index: 3, kind: input, shape index: {}]
  %s4 = inlined_call_operand.hbm [shape: f32[8,128], index: 4, kind: output, shape index: {}]
  %s5 = sld [smem:[#allocation0]]
  $region38: #{tpu_custom_call.1} parent=0
    _
  %s7 = ssub.s32 1, %s5
  %s8 = scalar_select 0, %s7, %s5
  $region1: #{tpu_custom_call.1} parent=0
    #allocation2 [shape = 'u8[4096]{0}', space=vmem, size = 0x1000, scoped, tag = 'input window, operand 0, single buffered']
    #allocation3 [shape = 's32[1]{0}', space=sflag, size = 0x4, scoped, tag = 'scoped memory for tpu_custom_call.1']
    #allocation4 [shape = 's32[1]{0}', space=sflag, size = 0x4, scoped, tag = 'scoped memory for tpu_custom_call.1']
    #allocation5 [shape = 'u8[131072]{0}', space=vmem, size = 0x20000, scoped, tag = 'input window, operand 1, single buffered']
    #allocation6 [shape = 's32[1]{0}', space=sflag, size = 0x4, scoped, tag = 'scoped memory for tpu_custom_call.1']
    #allocation7 [shape = 'u8[65536]{0}', space=vmem, size = 0x10000, scoped, tag = 'input window, operand 2, single buffered']
    #allocation8 [shape = 'u8[4096]{0}', space=vmem, size = 0x1000, scoped, tag = 'output window, operand 0, single buffered']
    %9 = vsyncpa [#allocation3], 0
    %10 = vsyncpa [#allocation6], 0
    %11 = vsyncpa [#allocation4], 0
    // Predicated region
    $region2: #{tpu_custom_call.1} parent=1 // pred_check
      _
    $region3: #{tpu_custom_call.1} parent=1 // pred_check_branch
      %13 = sbr.rel (0) target = $region5
    $region4: #{tpu_custom_call.1} parent=1 // pred_region
      %s15 = ssub.s32 128, 128
      %16 = vsyncadd [#allocation3], %s15
      %s18 = sshll.u32 [#allocation2], 4
      %s19 = int_to_ptr.vmem [resolvable:$true] %s18
      %21 = dma.hbm_to_vmem [thread:$0]  %s0, 128, %s19, [#allocation3]
    $region5: #{tpu_custom_call.1} parent=1 // pred_fallthru
      _
    // Predicated region
    $region6: #{tpu_custom_call.1} parent=1 // pred_check
      _
    $region7: #{tpu_custom_call.1} parent=1 // pred_check_branch
      %23 = sbr.rel (0) target = $region9
    $region8: #{tpu_custom_call.1} parent=1 // pred_region
      %s25 = ssub.s32 4096, 4096
      %26 = vsyncadd [#allocation6], %s25
      %s27 = sshll.u32 [#allocation5], 4
      %s28 = int_to_ptr.vmem [resolvable:$true] %s27
      %33 = dma.hbm_to_vmem [thread:$0]  %s1, 4096, %s28, [#allocation6], 128, 128, 8
    $region9: #{tpu_custom_call.1} parent=1 // pred_fallthru
      _
    // Predicated region
    $region10: #{tpu_custom_call.1} parent=1 // pred_check
      _
    $region11: #{tpu_custom_call.1} parent=1 // pred_check_branch
      %35 = sbr.rel (0) target = $region13
    $region12: #{tpu_custom_call.1} parent=1 // pred_region
      %s37 = ssub.s32 2048, 2048
      %38 = vsyncadd [#allocation6], %s37
      %s39 = sshll.u32 [#allocation7], 4
      %s40 = int_to_ptr.vmem [resolvable:$true] %s39
      %45 = dma.hbm_to_vmem [thread:$0]  %s2, 2048, %s40, [#allocation6], 128, 128, 8
    $region13: #{tpu_custom_call.1} parent=1 // pred_fallthru
      _
    // Predicated region
    $region14: #{tpu_custom_call.1} parent=1 // pred_check
      _
    $region15: #{tpu_custom_call.1} parent=1 // pred_check_branch
      %47 = sbr.rel (0) target = $region17
    $region16: #{tpu_custom_call.1} parent=1 // pred_region
      _
    $region17: #{tpu_custom_call.1} parent=1 // pred_fallthru
      _
    // Predicated region
    $region18: #{tpu_custom_call.1} parent=1 // pred_check
      _
    $region19: #{tpu_custom_call.1} parent=1 // pred_check_branch
      %49 = sbr.rel (0) target = $region21
    $region20: #{tpu_custom_call.1} parent=1 // pred_region
      %50 = dma.done [#allocation3], 128
    $region21: #{tpu_custom_call.1} parent=1 // pred_fallthru
      _
    // Predicated region
    $region22: #{tpu_custom_call.1} parent=1 // pred_check
      _
    $region23: #{tpu_custom_call.1} parent=1 // pred_check_branch
      %52 = sbr.rel (0) target = $region25
    $region24: #{tpu_custom_call.1} parent=1 // pred_region
      %53 = dma.done [#allocation6], 4096
    $region25: #{tpu_custom_call.1} parent=1 // pred_fallthru
      _
    // Predicated region
    $region26: #{tpu_custom_call.1} parent=1 // pred_check
      _
    $region27: #{tpu_custom_call.1} parent=1 // pred_check_branch
      %55 = sbr.rel (0) target = $region29
    $region28: #{tpu_custom_call.1} parent=1 // pred_region
      %56 = dma.done [#allocation6], 2048
    $region29: #{tpu_custom_call.1} parent=1 // pred_fallthru
      _
    %v57 = vld [vmem:[#allocation2] sm:$0xff]
    %v58 = vlaneseq
    %v59 = vand.u32 %v58, 127
    %v60 = vadd.s32 %v59, 128
    %vm61 = vcmp.eq.s32.totalorder %v59, 160
    %vm62 = vcmp.eq.s32.totalorder %v60, 160
    %v63 = vsel %vm61, 1.0, 0.0
    %v64 = vsel %vm62, 1.0, 0.0
    %65 = vset.pattern.permute.xlu0 0
    %66 = vperm.xlu0 %65, %v57
    %v67 = vpop.permute.xlu0 %66
    %vm68 = vcmp.eq.s32.totalorder %v67, %v59
    %vm69 = vcmp.eq.s32.totalorder %v67, %v60
    %v70 = vsel %vm68, 1.0, 0.0
    %v71 = vsel %vm69, 1.0, 0.0
    %v72 = vadd.f32 %v63, %v70
    %v73 = vadd.f32 %v64, %v71
    %74 = vset.pattern.permute.xlu0 1
    %75 = vperm.xlu0 %74, %v57
    %v76 = vpop.permute.xlu0 %75
    %vm77 = vcmp.eq.s32.totalorder %v76, %v59
    %vm78 = vcmp.eq.s32.totalorder %v76, %v60
    %v79 = vsel %vm77, 1.0, 0.0
    %v80 = vsel %vm78, 1.0, 0.0
    %v81 = vadd.f32 %v72, %v79
    %v82 = vadd.f32 %v73, %v80
    %83 = vset.pattern.permute.xlu0 2
    %84 = vperm.xlu0 %83, %v57
    %v85 = vpop.permute.xlu0 %84
    %vm86 = vcmp.eq.s32.totalorder %v85, %v59
    %vm87 = vcmp.eq.s32.totalorder %v85, %v60
    %v88 = vsel %vm86, 1.0, 0.0
    %v89 = vsel %vm87, 1.0, 0.0
    %v90 = vadd.f32 %v81, %v88
    %v91 = vadd.f32 %v82, %v89
    %92 = vset.pattern.permute.xlu0 3
    %93 = vperm.xlu0 %92, %v57
    %v94 = vpop.permute.xlu0 %93
    %vm95 = vcmp.eq.s32.totalorder %v94, %v59
    %vm96 = vcmp.eq.s32.totalorder %v94, %v60
    %v97 = vsel %vm95, 1.0, 0.0
    %v98 = vsel %vm96, 1.0, 0.0
    %v99 = vadd.f32 %v90, %v97
    %v100 = vadd.f32 %v91, %v98
    %101 = vset.pattern.permute.xlu0 4
    %102 = vperm.xlu0 %101, %v57
    %v103 = vpop.permute.xlu0 %102
    %vm104 = vcmp.eq.s32.totalorder %v103, %v59
    %vm105 = vcmp.eq.s32.totalorder %v103, %v60
    %v106 = vsel %vm104, 1.0, 0.0
    %v107 = vsel %vm105, 1.0, 0.0
    %v108 = vadd.f32 %v99, %v106
    %v109 = vadd.f32 %v100, %v107
    %110 = vset.pattern.permute.xlu0 5
    %111 = vperm.xlu0 %110, %v57
    %v112 = vpop.permute.xlu0 %111
    %vm113 = vcmp.eq.s32.totalorder %v112, %v59
    %vm114 = vcmp.eq.s32.totalorder %v112, %v60
    %v115 = vsel %vm113, 1.0, 0.0
    %v116 = vsel %vm114, 1.0, 0.0
    %v117 = vadd.f32 %v108, %v115
    %v118 = vadd.f32 %v109, %v116
    %119 = vset.pattern.permute.xlu0 6
    %120 = vperm.xlu0 %119, %v57
    %v121 = vpop.permute.xlu0 %120
    %vm122 = vcmp.eq.s32.totalorder %v121, %v59
    %vm123 = vcmp.eq.s32.totalorder %v121, %v60
    %v124 = vsel %vm122, 1.0, 0.0
    %v125 = vsel %vm123, 1.0, 0.0
    %v126 = vadd.f32 %v117, %v124
    %v127 = vadd.f32 %v118, %v125
    %128 = vset.pattern.permute.xlu0 7
    %129 = vperm.xlu0 %128, %v57
    %v130 = vpop.permute.xlu0 %129
    %vm131 = vcmp.eq.s32.totalorder %v130, %v59
    %vm132 = vcmp.eq.s32.totalorder %v130, %v60
    %v133 = vsel %vm131, 1.0, 0.0
    %v134 = vsel %vm132, 1.0, 0.0
    %v135 = vadd.f32 %v126, %v133
    %v136 = vadd.f32 %v127, %v134
    %137 = vset.pattern.permute.xlu0 8
    %138 = vperm.xlu0 %137, %v57
    %v139 = vpop.permute.xlu0 %138
    %vm140 = vcmp.eq.s32.totalorder %v139, %v59
    %vm141 = vcmp.eq.s32.totalorder %v139, %v60
    %v142 = vsel %vm140, 1.0, 0.0
    %v143 = vsel %vm141, 1.0, 0.0
    %v144 = vadd.f32 %v135, %v142
    %v145 = vadd.f32 %v136, %v143
    %146 = vset.pattern.permute.xlu0 9
    %147 = vperm.xlu0 %146, %v57
    %v148 = vpop.permute.xlu0 %147
    %vm149 = vcmp.eq.s32.totalorder %v148, %v59
    %vm150 = vcmp.eq.s32.totalorder %v148, %v60
    %v151 = vsel %vm149, 1.0, 0.0
    %v152 = vsel %vm150, 1.0, 0.0
    %v153 = vadd.f32 %v144, %v151
    %v154 = vadd.f32 %v145, %v152
    %v155 = vld [vmem:[#allocation5] sm:$0xff]
    %v156 = vld [vmem:[#allocation5 + $0x8] sm:$0xff]
    %v157 = vld [vmem:[#allocation5 + $0x10] sm:$0xff]
    %v158 = vld [vmem:[#allocation5 + $0x18] sm:$0xff]
    %v159 = vld [vmem:[#allocation5 + $0x20] sm:$0xff]
    %v160 = vld [vmem:[#allocation5 + $0x28] sm:$0xff]
    %v161 = vld [vmem:[#allocation5 + $0x30] sm:$0xff]
    %v162 = vld [vmem:[#allocation5 + $0x38] sm:$0xff]
    %v163 = vld [vmem:[#allocation5 + $0x40] sm:$0xff]
    %v164 = vld [vmem:[#allocation5 + $0x48] sm:$0xff]
    %v165 = vld [vmem:[#allocation5 + $0x50] sm:$0xff]
    %v166 = vld [vmem:[#allocation5 + $0x58] sm:$0xff]
    %v167 = vld [vmem:[#allocation5 + $0x60] sm:$0xff]
    %v168 = vld [vmem:[#allocation5 + $0x68] sm:$0xff]
    %v169 = vld [vmem:[#allocation5 + $0x70] sm:$0xff]
    %v170 = vld [vmem:[#allocation5 + $0x78] sm:$0xff]
    %v171 = vld [vmem:[#allocation5 + $0x80] sm:$0xff]
    %v172 = vld [vmem:[#allocation5 + $0x88] sm:$0xff]
    %v173 = vld [vmem:[#allocation5 + $0x90] sm:$0xff]
    %v174 = vld [vmem:[#allocation5 + $0x98] sm:$0xff]
    %v175 = vld [vmem:[#allocation5 + $0xa0] sm:$0xff]
    %v176 = vld [vmem:[#allocation5 + $0xa8] sm:$0xff]
    %v177 = vld [vmem:[#allocation5 + $0xb0] sm:$0xff]
    %v178 = vld [vmem:[#allocation5 + $0xb8] sm:$0xff]
    %v179 = vld [vmem:[#allocation5 + $0xc0] sm:$0xff]
    %v180 = vld [vmem:[#allocation5 + $0xc8] sm:$0xff]
    %v181 = vld [vmem:[#allocation5 + $0xd0] sm:$0xff]
    %v182 = vld [vmem:[#allocation5 + $0xd8] sm:$0xff]
    %v183 = vld [vmem:[#allocation5 + $0xe0] sm:$0xff]
    %v184 = vld [vmem:[#allocation5 + $0xe8] sm:$0xff]
    %v185 = vld [vmem:[#allocation5 + $0xf0] sm:$0xff]
    %v186 = vld [vmem:[#allocation5 + $0xf8] sm:$0xff]
    %187 = vmatprep.subr.mxu0 0.0
    %188 = vmatpush1.msra.mxu0 %v155
    %189 = vmatprep.subr.mxu0 0.0
    %190 = vmatpush1.msra.mxu0 %v156
    %191 = vmatprep.subr.mxu0 0.0
    %192 = vmatpush1.msra.mxu0 %v157
    %193 = vmatprep.subr.mxu0 0.0
    %194 = vmatpush1.msra.mxu0 %v158
    %195 = vmatprep.subr.mxu0 0.0
    %196 = vmatpush1.msra.mxu0 %v159
    %197 = vmatprep.subr.mxu0 0.0
    %198 = vmatpush1.msra.mxu0 %v160
    %199 = vmatprep.subr.mxu0 0.0
    %200 = vmatpush1.msra.mxu0 %v161
    %201 = vmatprep.subr.mxu0 0.0
    %202 = vmatpush1.msra.mxu0 %v162
    %203 = vmatprep.subr.mxu0 0.0
    %204 = vmatpush1.msra.mxu0 %v163
    %205 = vmatprep.subr.mxu0 0.0
    %206 = vmatpush1.msra.mxu0 %v164
    %207 = vmatprep.subr.mxu0 0.0
    %208 = vmatpush1.msra.mxu0 %v165
    %209 = vmatprep.subr.mxu0 0.0
    %210 = vmatpush1.msra.mxu0 %v166
    %211 = vmatprep.subr.mxu0 0.0
    %212 = vmatpush1.msra.mxu0 %v167
    %213 = vmatprep.subr.mxu0 0.0
    %214 = vmatpush1.msra.mxu0 %v168
    %215 = vmatprep.subr.mxu0 0.0
    %216 = vmatpush1.msra.mxu0 %v169
    %217 = vmatprep.subr.mxu0 0.0
    %218 = vmatpush1.msra.mxu0 %v170
    %219 = vmatprep.subr.mxu0 0.0
    %220 = vmatpush1.msra.mxu0 %v171
    %221 = vmatprep.subr.mxu0 0.0
    %222 = vmatpush1.msra.mxu0 %v172
    %223 = vmatprep.subr.mxu0 0.0
    %224 = vmatpush1.msra.mxu0 %v173
    %225 = vmatprep.subr.mxu0 0.0
    %226 = vmatpush1.msra.mxu0 %v174
    %227 = vmatprep.subr.mxu0 0.0
    %228 = vmatpush1.msra.mxu0 %v175
    %229 = vmatprep.subr.mxu0 0.0
    %230 = vmatpush1.msra.mxu0 %v176
    %231 = vmatprep.subr.mxu0 0.0
    %232 = vmatpush1.msra.mxu0 %v177
    %233 = vmatprep.subr.mxu0 0.0
    %234 = vmatpush1.msra.mxu0 %v178
    %235 = vmatprep.subr.mxu0 0.0
    %236 = vmatpush1.msra.mxu0 %v179
    %237 = vmatprep.subr.mxu0 0.0
    %238 = vmatpush1.msra.mxu0 %v180
    %239 = vmatprep.subr.mxu0 0.0
    %240 = vmatpush1.msra.mxu0 %v181
    %241 = vmatprep.subr.mxu0 0.0
    %242 = vmatpush1.msra.mxu0 %v182
    %243 = vmatprep.subr.mxu0 0.0
    %244 = vmatpush1.msra.mxu0 %v183
    %245 = vmatprep.subr.mxu0 0.0
    %246 = vmatpush1.msra.mxu0 %v184
    %247 = vmatprep.subr.mxu0 0.0
    %248 = vmatpush1.msra.mxu0 %v185
    %249 = vmatprep.subr.mxu0 0.0
    %250 = vmatpush1.msra.mxu0 %v186
    %251 = vmatprep.mubr.f32.mxu0 %v154
    %252 = vmatmul.mubr.f32.gmra.mrb[0].mxu0 %v153
    %v253 = vpop.f32.mrb[0].mxu0
    %v254 = vadd.f32 0.0, %v253
    %v255 = vpop.f32.mrb[0].mxu0
    %256 = vdwg.mxu0
    %v257 = vmax.f32 %v254, 0.0
    %v258 = vld [vmem:[#allocation7] sm:$0xff]
    %v259 = vld [vmem:[#allocation7 + $0x8] sm:$0xff]
    %v260 = vld [vmem:[#allocation7 + $0x10] sm:$0xff]
    %v261 = vld [vmem:[#allocation7 + $0x18] sm:$0xff]
    %v262 = vld [vmem:[#allocation7 + $0x20] sm:$0xff]
    %v263 = vld [vmem:[#allocation7 + $0x28] sm:$0xff]
    %v264 = vld [vmem:[#allocation7 + $0x30] sm:$0xff]
    %v265 = vld [vmem:[#allocation7 + $0x38] sm:$0xff]
    %v266 = vld [vmem:[#allocation7 + $0x40] sm:$0xff]
    %v267 = vld [vmem:[#allocation7 + $0x48] sm:$0xff]
    %v268 = vld [vmem:[#allocation7 + $0x50] sm:$0xff]
    %v269 = vld [vmem:[#allocation7 + $0x58] sm:$0xff]
    %v270 = vld [vmem:[#allocation7 + $0x60] sm:$0xff]
    %v271 = vld [vmem:[#allocation7 + $0x68] sm:$0xff]
    %v272 = vld [vmem:[#allocation7 + $0x70] sm:$0xff]
    %v273 = vld [vmem:[#allocation7 + $0x78] sm:$0xff]
    %v274 = vld [vmem:[%s3] sm:$0x1]
    %v276 = vlaneseq
    %v277 = vshrl.u32 %v276, 7
    %v278 = vsub.s32 0, %v277
    %v279 = vrot.slane %v274, %v278
    %281 = vmatprep.subr.mxu0 0.0
    %282 = vmatpush1.msra.mxu0 %v258
    %283 = vmatprep.subr.mxu0 0.0
    %284 = vmatpush1.msra.mxu0 %v259
    %285 = vmatprep.subr.mxu0 0.0
    %286 = vmatpush1.msra.mxu0 %v260
    %287 = vmatprep.subr.mxu0 0.0
    %288 = vmatpush1.msra.mxu0 %v261
    %289 = vmatprep.subr.mxu0 0.0
    %290 = vmatpush1.msra.mxu0 %v262
    %291 = vmatprep.subr.mxu0 0.0
    %292 = vmatpush1.msra.mxu0 %v263
    %293 = vmatprep.subr.mxu0 0.0
    %294 = vmatpush1.msra.mxu0 %v264
    %295 = vmatprep.subr.mxu0 0.0
    %296 = vmatpush1.msra.mxu0 %v265
    %297 = vmatprep.subr.mxu0 0.0
    %298 = vmatpush1.msra.mxu0 %v266
    %299 = vmatprep.subr.mxu0 0.0
    %300 = vmatpush1.msra.mxu0 %v267
    %301 = vmatprep.subr.mxu0 0.0
    %302 = vmatpush1.msra.mxu0 %v268
    %303 = vmatprep.subr.mxu0 0.0
    %304 = vmatpush1.msra.mxu0 %v269
    %305 = vmatprep.subr.mxu0 0.0
    %306 = vmatpush1.msra.mxu0 %v270
    %307 = vmatprep.subr.mxu0 0.0
    %308 = vmatpush1.msra.mxu0 %v271
    %309 = vmatprep.subr.mxu0 0.0
    %310 = vmatpush1.msra.mxu0 %v272
    %311 = vmatprep.subr.mxu0 0.0
    %312 = vmatpush1.msra.mxu0 %v273
    %313 = vmatprep.subr.mxu0 0.0
    %314 = vmatpush1.msra.mxu0 0.0
    %315 = vmatprep.subr.mxu0 0.0
    %316 = vmatpush1.msra.mxu0 0.0
    %317 = vmatprep.subr.mxu0 0.0
    %318 = vmatpush1.msra.mxu0 0.0
    %319 = vmatprep.subr.mxu0 0.0
    %320 = vmatpush1.msra.mxu0 0.0
    %321 = vmatprep.subr.mxu0 0.0
    %322 = vmatpush1.msra.mxu0 0.0
    %323 = vmatprep.subr.mxu0 0.0
    %324 = vmatpush1.msra.mxu0 0.0
    %325 = vmatprep.subr.mxu0 0.0
    %326 = vmatpush1.msra.mxu0 0.0
    %327 = vmatprep.subr.mxu0 0.0
    %328 = vmatpush1.msra.mxu0 0.0
    %329 = vmatprep.subr.mxu0 0.0
    %330 = vmatpush1.msra.mxu0 0.0
    %331 = vmatprep.subr.mxu0 0.0
    %332 = vmatpush1.msra.mxu0 0.0
    %333 = vmatprep.subr.mxu0 0.0
    %334 = vmatpush1.msra.mxu0 0.0
    %335 = vmatprep.subr.mxu0 0.0
    %336 = vmatpush1.msra.mxu0 0.0
    %337 = vmatprep.subr.mxu0 0.0
    %338 = vmatpush1.msra.mxu0 0.0
    %339 = vmatprep.subr.mxu0 0.0
    %340 = vmatpush1.msra.mxu0 0.0
    %341 = vmatprep.subr.mxu0 0.0
    %342 = vmatpush1.msra.mxu0 0.0
    %343 = vmatprep.subr.mxu0 0.0
    %344 = vmatpush1.msra.mxu0 0.0
    %345 = vmatprep.mubr.f32.mxu0 0.0
    %346 = vmatmul.mubr.f32.gmra.mrb[0].mxu0 %v257
    %v347 = vpop.f32.mrb[0].mxu0
    %v348 = vadd.f32 %v279, %v347
    %v349 = vpop.f32.mrb[0].mxu0
    %350 = vdwg.mxu0
    %v351 = vxor.u32 %v348, 2147483648
    %v352 = vmul.f32 %v351, 1.442695
    %v353 = vpow.pop %v352
    %v354 = vadd.f32 %v353, 1.0
    %v355 = vrcp.pop %v354
    %v356 = vmul.f32 1.0, %v355
    %357 = vst [vmem:[#allocation8] sm:$0xff] %v356
    // Predicated region
    $region30: #{tpu_custom_call.1} parent=1 // pred_check
      _
    $region31: #{tpu_custom_call.1} parent=1 // pred_check_branch
      %359 = sbr.rel (0) target = $region33
    $region32: #{tpu_custom_call.1} parent=1 // pred_region
      %s361 = ssub.s32 128, 128
      %362 = vsyncadd [#allocation4], %s361
      %s364 = sshll.u32 [#allocation8], 4
      %s365 = int_to_ptr.vmem [resolvable:$true] %s364
      %367 = dma.vmem_to_hbm [thread:$0]  %s365, 128, %s4, [#allocation4]
    $region33: #{tpu_custom_call.1} parent=1 // pred_fallthru
      _
    // Predicated region
    $region34: #{tpu_custom_call.1} parent=1 // pred_check
      _
    $region35: #{tpu_custom_call.1} parent=1 // pred_check_branch
      %369 = sbr.rel (0) target = $region37
    $region36: #{tpu_custom_call.1} parent=1 // pred_region
      %370 = dma.done [#allocation4], 128
    $region37: #{tpu_custom_call.1} parent=1 // pred_fallthru
      _
    %371 = vsyncpa [#allocation3], 1
    %372 = vsyncpa [#allocation6], 1
    %373 = vsyncpa [#allocation4], 1

</llo_original>
